<compile_context>
chip_gen: v7x
topology: tpu7x:2x2x1
jax: 0.10.0
libtpu: 0.0.40
codegen_flags: <defaults>
</compile_context>

<pallas_src>
import math

import jax
import jax.numpy as jnp
from jax.experimental import pallas as pl
from jax.experimental.pallas import tpu as pltpu


# ----------------------------------------------------------------------------- #
# Pallas kernels
# ----------------------------------------------------------------------------- #
def _sqdist_kernel(ck_ref, ct_ref, d_ref):
    ck = ck_ref[...]                                        # (K, 3)
    ct = ct_ref[...]                                        # (3, K)
    g = jnp.dot(ck, ct, preferred_element_type=jnp.float32)             # (K, K)
    sq_col = jnp.sum(ck * ck, axis=1, keepdims=True)                    # (K, 1)
    sq_row = jnp.sum(ct * ct, axis=0, keepdims=True)                    # (1, K)
    d_ref[...] = sq_col + sq_row - 2.0 * g


def pairwise_sqdist(center, center_t):
    """center: (B, K, 3), center_t: (B, 3, K) -> squared pairwise distances (B, K, K)."""
    B, K, _ = center.shape
    return pl.pallas_call(
        _sqdist_kernel,
        out_shape=jax.ShapeDtypeStruct((B, K, K), jnp.float32),
        grid_spec=pltpu.PrefetchScalarGridSpec(
            num_scalar_prefetch=0,
            grid=(B,),
            in_specs=[
                pl.BlockSpec((None, K, 3), lambda bi: (bi, 0, 0)),
                pl.BlockSpec((None, 3, K), lambda bi: (bi, 0, 0)),
            ],
            out_specs=pl.BlockSpec((None, K, K), lambda bi: (bi, 0, 0)),
        ),
        compiler_params=pltpu.CompilerParams(dimension_semantics=("parallel",)),
    )(center, center_t)


def fused_graph(feats, mask, idx_t, layers, gf_w_parts, gf_b, *, hidden, k, slope=0.2):
    """Whole DGCNN stage in one kernel per batch element.

    feats: (B, C0, K) f32, mask: (B, 1, K) f32, idx_t: (B, k, K) int32 (kNN indices).
    layers: list of (w_stacked bf16 (2*Cout, Cin), b_folded f32 (Cout, 1), Cout).
    gf_w_parts: per-layer (hidden, Cout_l) bf16 slices of the final graph conv weight.
    Returns (B, hidden, K) f32.
    """
    B, C0, K = feats.shape
    L = len(layers)
    couts = tuple(c for (_, _, c) in layers)

    def kernel(*refs):
        mask_ref, x_ref, idx_ref = refs[0], refs[1], refs[2]
        lw = refs[3:3 + 2 * L]
        gw = refs[3 + 2 * L:3 + 3 * L]
        bg_ref = refs[3 + 3 * L]
        o_ref = refs[3 + 3 * L + 1]

        x = x_ref[...] * mask_ref[...]                       # objectness mask fused
        idxv = idx_ref[...]                                  # (k, K) int32
        iota = jax.lax.broadcasted_iota(jnp.int32, (K, K), 0)  # row index j

        cur = x
        outs = []
        for li in range(L):
            w_ref, b_ref = lw[2 * li], lw[2 * li + 1]
            cout = couts[li]
            # Stacked edge conv: rows [s*(W1-W2); s*W2] (BN folded), one MXU matmul.
            y2 = jnp.dot(w_ref[...], cur.astype(jnp.bfloat16),
                         preferred_element_type=jnp.float32)           # (2*cout, K)
            u = y2[:cout] + b_ref[...]
            v = y2[cout:]
            # In-kernel kNN gather: one-hot (K,K) matmul per neighbor slot, max over k.
            vmax = None
            for n in range(k):
                sel = idxv[n:n + 1, :]                                  # (1, K)
                onehot = (iota == sel).astype(jnp.float32)              # (K, K)
                g = jax.lax.dot_general(v, onehot, (((1,), (0,)), ((), ())),
                                        preferred_element_type=jnp.float32)
                vmax = g if vmax is None else jnp.maximum(vmax, g)
            y = u + vmax
            cur = jnp.maximum(y, slope * y)                  # LeakyReLU(0.2)
            outs.append(cur)

        # Final graph conv over the concatenation of all layer outputs (BN folded),
        # expressed as a sum of per-layer matmuls (no in-kernel concat / relayout).
        acc = bg_ref[...]                                    # (hidden, 1)
        for li in range(L):
            acc = acc + jnp.dot(gw[li][...], outs[li].astype(jnp.bfloat16),
                                preferred_element_type=jnp.float32)
        o_ref[...] = jnp.maximum(acc, slope * acc)

    in_specs = [
        pl.BlockSpec((None, 1, K), lambda bi: (bi, 0, 0)),   # objectness mask
        pl.BlockSpec((None, C0, K), lambda bi: (bi, 0, 0)),  # features (+lang)
        pl.BlockSpec((None, k, K), lambda bi: (bi, 0, 0)),   # neighbor indices
    ]
    args = [mask, feats, idx_t]
    for (w, b, _) in layers:
        in_specs.append(pl.BlockSpec(w.shape, lambda bi: (0, 0)))
        in_specs.append(pl.BlockSpec(b.shape, lambda bi: (0, 0)))
        args += [w, b]
    for w in gf_w_parts:
        in_specs.append(pl.BlockSpec(w.shape, lambda bi: (0, 0)))
        args.append(w)
    in_specs.append(pl.BlockSpec(gf_b.shape, lambda bi: (0, 0)))
    args.append(gf_b)

    return pl.pallas_call(
        kernel,
        out_shape=jax.ShapeDtypeStruct((B, hidden, K), jnp.float32),
        grid_spec=pltpu.PrefetchScalarGridSpec(
            num_scalar_prefetch=0,
            grid=(B,),
            in_specs=in_specs,
            out_specs=pl.BlockSpec((None, hidden, K), lambda bi: (bi, 0, 0)),
        ),
        compiler_params=pltpu.CompilerParams(dimension_semantics=("parallel",)),
    )(*args)


def _match_kernel(x_ref, w1_ref, b1_ref, w2_ref, b2_ref, w3_ref, b3_ref, o_ref):
    # Fused conv -> ReLU -> [BN folded into next conv] -> conv -> ReLU -> conv(->1).
    h = jnp.dot(w1_ref[...], x_ref[...].astype(jnp.bfloat16),
                preferred_element_type=jnp.float32) + b1_ref[...]
    h = jnp.maximum(h, 0.0)
    h = jnp.dot(w2_ref[...], h.astype(jnp.bfloat16),
                preferred_element_type=jnp.float32) + b2_ref[...]
    h = jnp.maximum(h, 0.0)
    o_ref[...] = jnp.dot(w3_ref[...], h.astype(jnp.bfloat16),
                         preferred_element_type=jnp.float32) + b3_ref[...]


def fused_match(x, w1, b1, w2, b2, w3, b3):
    """x: (B, H, K) -> (B, K): the whole `match` head in one kernel per batch."""
    B, H, K = x.shape
    out = pl.pallas_call(
        _match_kernel,
        out_shape=jax.ShapeDtypeStruct((B, 1, K), jnp.float32),
        grid_spec=pltpu.PrefetchScalarGridSpec(
            num_scalar_prefetch=0,
            grid=(B,),
            in_specs=[
                pl.BlockSpec((None, H, K), lambda bi: (bi, 0, 0)),
                pl.BlockSpec((H, H), lambda bi: (0, 0)),
                pl.BlockSpec((H, 1), lambda bi: (0, 0)),
                pl.BlockSpec((H, H), lambda bi: (0, 0)),
                pl.BlockSpec((H, 1), lambda bi: (0, 0)),
                pl.BlockSpec((1, H), lambda bi: (0, 0)),
                pl.BlockSpec((1, 1), lambda bi: (0, 0)),
            ],
            out_specs=pl.BlockSpec((None, 1, K), lambda bi: (bi, 0, 0)),
        ),
        compiler_params=pltpu.CompilerParams(dimension_semantics=("parallel",)),
    )(x, w1, b1, w2, b2, w3, b3)
    return out[:, 0, :]


def pointwise_conv(x, w, b, mask=None):
    """1x1 Conv1d (optionally with fused objectness mask) for skip/fuse_twice paths."""
    B, Cin, K = x.shape
    Cout = w.shape[0]
    has_mask = mask is not None

    def kernel(*refs):
        if has_mask:
            w_ref, b_ref, x_ref, m_ref, o_ref = refs
            xv = x_ref[...] * m_ref[...]
        else:
            w_ref, b_ref, x_ref, o_ref = refs
            xv = x_ref[...]
        o_ref[...] = jnp.dot(w_ref[...], xv.astype(jnp.bfloat16),
                             preferred_element_type=jnp.float32) + b_ref[...]

    in_specs = [
        pl.BlockSpec((Cout, Cin), lambda bi: (0, 0)),
        pl.BlockSpec((Cout, 1), lambda bi: (0, 0)),
        pl.BlockSpec((None, Cin, K), lambda bi: (bi, 0, 0)),
    ]
    args = [w.astype(jnp.bfloat16), b, x]
    if has_mask:
        in_specs.append(pl.BlockSpec((None, 1, K), lambda bi: (bi, 0, 0)))
        args.append(mask)
    return pl.pallas_call(
        kernel,
        out_shape=jax.ShapeDtypeStruct((B, Cout, K), jnp.float32),
        grid_spec=pltpu.PrefetchScalarGridSpec(
            num_scalar_prefetch=0,
            grid=(B,),
            in_specs=in_specs,
            out_specs=pl.BlockSpec((None, Cout, K), lambda bi: (bi, 0, 0)),
        ),
        compiler_params=pltpu.CompilerParams(dimension_semantics=("parallel",)),
    )(*args)


# ----------------------------------------------------------------------------- #
# Parameter init & folding
# ----------------------------------------------------------------------------- #
def conv1d_init(key, c_out, c_in):
    """PyTorch default Conv1d init (kaiming-uniform-ish bounds)."""
    k1, k2 = jax.random.split(key)
    bound = 1.0 / math.sqrt(c_in)
    w = jax.random.uniform(k1, (c_out, c_in), jnp.float32, -bound, bound)
    b = jax.random.uniform(k2, (c_out, 1), jnp.float32, -bound, bound)
    return w, b


def bn_affine(c, eps=1e-5):
    """Eval-mode BatchNorm1d right after init: scale = 1/sqrt(var+eps), shift = 0."""
    scale = jnp.full((c, 1), (1.0 + eps) ** -0.5, jnp.float32)
    shift = jnp.zeros((c, 1), jnp.float32)
    return scale, shift


# ----------------------------------------------------------------------------- #
# MatchModule
# ----------------------------------------------------------------------------- #
class MatchModulePallas:
    def __init__(self, key, num_proposals=256, lang_size=256, hidden_size=128,
                 feat_dim=128, fuse_twice=False, skip_connection=False,
                 k_neighbors=7, intermediate_feat_dim=(64, 64, 128)):
        self.num_proposals = num_proposals
        self.lang_size = lang_size
        self.hidden_size = hidden_size
        self.feat_dim = feat_dim
        self.fuse_twice = fuse_twice
        self.skip_connection = skip_connection
        self.k_neighbors = k_neighbors

        initial_dim = feat_dim + lang_size
        L = len(intermediate_feat_dim)
        keys = jax.random.split(key, 6 + L)
        ki = 0

        # self.fuse / self.reduce (registered even if unused, like the nn.Module).
        self.fuse_w, self.fuse_b = conv1d_init(keys[ki], hidden_size, lang_size + hidden_size); ki += 1
        self.reduce_w, self.reduce_b = conv1d_init(keys[ki], hidden_size, initial_dim); ki += 1

        # self.match: Conv1d -> ReLU -> BN -> Conv1d -> ReLU -> BN -> Conv1d(->1).
        # Eval-mode BNs are folded forward into the following conv weights.
        m1_w, m1_b = conv1d_init(keys[ki], hidden_size, hidden_size); ki += 1
        bn1_s, bn1_t = bn_affine(hidden_size)
        m2_w, m2_b = conv1d_init(keys[ki], hidden_size, hidden_size); ki += 1
        bn2_s, bn2_t = bn_affine(hidden_size)
        m3_w, m3_b = conv1d_init(keys[ki], 1, hidden_size); ki += 1
        self.m1_w = m1_w.astype(jnp.bfloat16)
        self.m1_b = m1_b
        self.m2_w_f = (m2_w * bn1_s.reshape(1, -1)).astype(jnp.bfloat16)
        self.m2_b_f = m2_w @ bn1_t + m2_b
        self.m3_w_f = (m3_w * bn2_s.reshape(1, -1)).astype(jnp.bfloat16)
        self.m3_b_f = m3_w @ bn2_t + m3_b

        # self.graph: DGCNN EdgeConv stack.  Weights stacked as [s*(W1-W2); s*W2]
        # (BN folded, scale > 0 so folding commutes with max / LeakyReLU).
        layers = []
        c_in = initial_dim
        for c_out in intermediate_feat_dim:
            w, b = conv1d_init(keys[ki], c_out, 2 * c_in); ki += 1
            s, t = bn_affine(c_out)
            w1, w2 = w[:, :c_in], w[:, c_in:]
            w_stk = jnp.concatenate([s * (w1 - w2), s * w2], axis=0)   # (2*Cout, Cin)
            b_fold = s * b + t
            layers.append((w_stk.astype(jnp.bfloat16), b_fold, c_out))
            c_in = c_out
        self.graph_layers = layers

        total = sum(intermediate_feat_dim)
        gf_w, gf_b = conv1d_init(keys[ki], hidden_size, total); ki += 1
        gf_s, gf_t = bn_affine(hidden_size)
        gw = gf_s * gf_w
        parts, off = [], 0
        for c_out in intermediate_feat_dim:
            parts.append(gw[:, off:off + c_out].astype(jnp.bfloat16))
            off += c_out
        self.gf_w_parts = parts
        self.gf_b = gf_s * gf_b + gf_t

    def __call__(self, data_dict):
        features = data_dict['aggregated_vote_features']     # (B, K, feat_dim)
        obj = data_dict['objectness_scores']                 # (B, K, 2)
        lang = data_dict['lang_emb']                         # (B, lang_size)
        center = data_dict['center']                         # (B, K, 3)
        B = features.shape[0]
        K = self.num_proposals

        mask = jnp.argmax(obj, axis=2).astype(jnp.float32)[:, None, :]           # (B,1,K)
        lang_feat = jnp.broadcast_to(lang[:, None, :], (B, K, self.lang_size))   # (B,K,lang)
        feats = jnp.transpose(jnp.concatenate([features, lang_feat], axis=-1),
                              (0, 2, 1))                                          # (B,C0,K)
        center_t = jnp.transpose(center, (0, 2, 1))                               # (B,3,K)

        # kNN on proposal centers: Pallas pairwise sqdist + XLA top_k (glue).
        d = pairwise_sqdist(center, center_t)                                     # (B,K,K)
        _, idx = jax.lax.top_k(-d, self.k_neighbors)                              # (B,K,k)
        idx_t = jnp.transpose(idx, (0, 2, 1)).astype(jnp.int32)                   # (B,k,K)

        graph_out = fused_graph(feats, mask, idx_t, self.graph_layers,
                                self.gf_w_parts, self.gf_b,
                                hidden=self.hidden_size, k=self.k_neighbors)
        if self.skip_connection:
            graph_out = graph_out + pointwise_conv(feats, self.reduce_w,
                                                   self.reduce_b, mask=mask)

        if self.fuse_twice:
            g = jnp.transpose(graph_out, (0, 2, 1))
            f = jnp.transpose(jnp.concatenate([g, lang_feat], axis=-1), (0, 2, 1))
            f = pointwise_conv(f, self.fuse_w, self.fuse_b)
            conf = fused_match(f, self.m1_w, self.m1_b, self.m2_w_f, self.m2_b_f,
                               self.m3_w_f, self.m3_b_f)
        else:
            conf = fused_match(graph_out, self.m1_w, self.m1_b, self.m2_w_f,
                               self.m2_b_f, self.m3_w_f, self.m3_b_f)

        out = dict(data_dict)
        out['cluster_ref'] = conf
        return out


# ----------------------------------------------------------------------------- #
if __name__ == "__main__":
    key = jax.random.PRNGKey(0)
    kp, kf, ko, kl, kc = jax.random.split(key, 5)

    # Small, lane-dense shapes: K is a multiple of 128 so every store is unmasked.
    B, K, FEAT, LANG, HID = 2, 128, 32, 32, 32
    module = MatchModulePallas(
        kp, num_proposals=K, lang_size=LANG, hidden_size=HID, feat_dim=FEAT,
        k_neighbors=7, intermediate_feat_dim=(16, 16, 32),
        fuse_twice=False, skip_connection=False)

    data = {
        'aggregated_vote_features': jax.random.normal(kf, (B, K, FEAT), jnp.float32),
        'objectness_scores': jax.random.normal(ko, (B, K, 2), jnp.float32),
        'lang_emb': jax.random.normal(kl, (B, LANG), jnp.float32),
        'center': jax.random.normal(kc, (B, K, 3), jnp.float32),
    }

    out = module(data)
    conf = jax.block_until_ready(out['cluster_ref'])
    assert conf.shape == (B, K), conf.shape
    assert bool(jnp.all(jnp.isfinite(conf)))
    print("KERNEL_OK")
</pallas_src>

<mosaic_0001>
module attributes {stable_mosaic.version = 11 : i64} {
  func.func @_sqdist_kernel(%arg0: i32, %arg1: memref<1x128x3xf32, #tpu.memory_space<vmem>>, %arg2: memref<1x3x128xf32, #tpu.memory_space<vmem>>, %arg3: memref<1x128x128xf32, #tpu.memory_space<vmem>>) attributes {dimension_semantics = [#tpu.dimension_semantics<parallel>], iteration_bounds = array<i64: 2>, scalar_prefetch = 0 : i64, scratch_operands = 0 : i64, tpu.core_type = #tpu.core_type<tc>, window_params = [{transform_indices = @transform_0, window_bounds = array<i64: 1, 128, 3>}, {transform_indices = @transform_1, window_bounds = array<i64: 1, 3, 128>}, {transform_indices = @transform_2, window_bounds = array<i64: 1, 128, 128>}]} {
    %c0 = arith.constant 0 : index
    %c0_0 = arith.constant 0 : index
    %c0_1 = arith.constant 0 : index
    %0 = vector.load %arg1[%c0, %c0_0, %c0_1] : memref<1x128x3xf32, #tpu.memory_space<vmem>>, vector<1x128x3xf32>
    %1 = vector.shape_cast %0 : vector<1x128x3xf32> to vector<128x3xf32>
    %c0_2 = arith.constant 0 : index
    %c0_3 = arith.constant 0 : index
    %c0_4 = arith.constant 0 : index
    %2 = vector.load %arg2[%c0_2, %c0_3, %c0_4] : memref<1x3x128xf32, #tpu.memory_space<vmem>>, vector<1x3x128xf32>
    %3 = vector.shape_cast %2 : vector<1x3x128xf32> to vector<3x128xf32>
    %cst = arith.constant dense<0.000000e+00> : vector<128x128xf32>
    %4 = tpu.matmul %1, %3, %cst {dimension_numbers = #tpu.dot_dimension_numbers<[1], [0], [0], [1], [0, 0, 1, 1], [], []>} : vector<128x3xf32>, vector<3x128xf32>, vector<128x128xf32> -> vector<128x128xf32>
    %5 = arith.mulf %1, %1 : vector<128x3xf32>
    %cst_5 = arith.constant dense<0.000000e+00> : vector<128xf32>
    %6 = vector.multi_reduction <add>, %5, %cst_5 [1] : vector<128x3xf32> to vector<128xf32>
    %7 = vector.shape_cast %6 : vector<128xf32> to vector<128x1xf32>
    %8 = arith.mulf %3, %3 : vector<3x128xf32>
    %cst_6 = arith.constant dense<0.000000e+00> : vector<128xf32>
    %9 = vector.multi_reduction <add>, %8, %cst_6 [0] : vector<3x128xf32> to vector<128xf32>
    %10 = vector.shape_cast %9 : vector<128xf32> to vector<1x128xf32>
    %11 = vector.broadcast %7 : vector<128x1xf32> to vector<128x128xf32>
    %12 = vector.broadcast %10 : vector<1x128xf32> to vector<128x128xf32>
    %13 = arith.addf %11, %12 : vector<128x128xf32>
    %cst_7 = arith.constant 2.000000e+00 : f32
    %14 = vector.broadcast %cst_7 : f32 to vector<128x128xf32>
    %15 = arith.mulf %14, %4 : vector<128x128xf32>
    %16 = arith.subf %13, %15 : vector<128x128xf32>
    %c0_8 = arith.constant 0 : index
    %c0_9 = arith.constant 0 : index
    %c0_10 = arith.constant 0 : index
    %17 = vector.load %arg3[%c0_8, %c0_9, %c0_10] : memref<1x128x128xf32, #tpu.memory_space<vmem>>, vector<1x128x128xf32>
    %18 = vector.shape_cast %17 : vector<1x128x128xf32> to vector<128x128xf32>
    %19 = vector.shape_cast %16 : vector<128x128xf32> to vector<1x128x128xf32>
    tpu.vector_store %arg3[%c0_8, %c0_9, %c0_10], %19 {strides = array<i32>} : memref<1x128x128xf32, #tpu.memory_space<vmem>>, vector<1x128x128xf32>,
    return
  }
  func.func @transform_0(%arg0: i32) -> (i32, i32, i32) {
    %c0_i32 = arith.constant 0 : i32
    %c0_i32_0 = arith.constant 0 : i32
    %c0_i32_1 = arith.constant 0 : i32
    return %arg0, %c0_i32, %c0_i32_0 : i32, i32, i32
  }
  func.func @transform_1(%arg0: i32) -> (i32, i32, i32) {
    %c0_i32 = arith.constant 0 : i32
    %c0_i32_0 = arith.constant 0 : i32
    %c0_i32_1 = arith.constant 0 : i32
    return %arg0, %c0_i32, %c0_i32_0 : i32, i32, i32
  }
  func.func @transform_2(%arg0: i32) -> (i32, i32, i32) {
    %c0_i32 = arith.constant 0 : i32
    %c0_i32_0 = arith.constant 0 : i32
    %c0_i32_1 = arith.constant 0 : i32
    return %arg0, %c0_i32, %c0_i32_0 : i32, i32, i32
  }
}

</mosaic_0001>

<llo_original>
// kernel: tpu_custom_call.1
$region0: #{tpu_custom_call.1}
  #allocation0 [shape = 'u32[]', space=smem, size = 0x4, offset = 0x4, fixed_abs, tag = 'smem constant byte address 0x4 - core index']
  #allocation1 [shape = 'u32[144,128]{1,0:T(1,128)}', space=vmem, size = 0x12000, scoped, tag = 'internal scratch']
  %s0 = inlined_call_operand.vmem [shape: f32[2,128,3], index: 0, kind: input, shape index: {}]
  %s1 = inlined_call_operand.vmem [shape: f32[2,3,128], index: 1, kind: input, shape index: {}]
  %s2 = inlined_call_operand.hbm [shape: f32[2,128,128], index: 2, kind: output, shape index: {}]
  %s3 = sld [smem:[#allocation0]]
  $region41: #{tpu_custom_call.1} parent=0
    _
  %s5 = ssub.s32 1, %s3
  %s6 = scalar_select 0, %s5, %s3
  $region1: #{tpu_custom_call.1} parent=0
    #allocation2 [shape = 'u8[131072]{0}', space=vmem, size = 0x20000, scoped, tag = 'output window, operand 0']
    #allocation3 [shape = 's32[2]{0}', space=sflag, size = 0x8, scoped, tag = 'scoped memory for tpu_custom_call.1']
    %7 = vsyncpa [#allocation3], 0
    %s8 = scalar_lea.sflag [#allocation3], 1
    %9 = vsyncpa %s8, 0
    loop: start=0, step=1, limit=4
    $region2: #{tpu_custom_call.1} parent=1 // loop_pre_header
      _
    $region3: #{tpu_custom_call.1} parent=1 // loop_header
      %s11 = sphi 0, %s15
      %p12 = scmp.ge.s32.totalorder %s11, 4
      %s21 = sphi 0, %s23
      %s24 = sphi 0, %s21
      %s25 = sphi 0, %s24
      %s41 = sphi 0, %s25
      %s47 = sphi 0, %s49
      %s50 = sphi 0, %s47
      %s51 = sphi 0, %s50
      %s67 = sphi 0, %s51
      %s73 = sphi 0, %s75
      %s76 = sphi 0, %s73
      %s77 = sphi 0, %s76
      %s93 = sphi 0, %s77
    $region4: #{tpu_custom_call.1} parent=1 // loop_header_branch
      %14 = sbr.rel (%p12) target = $region8
    $region5: #{tpu_custom_call.1} parent=1 // loop_body
      %s16 = ssub.s32 %s11, 1
      %s17 = ssub.s32 %s11, 2
      %s18 = sadd.s32 %s11, 1
      %s19 = ssub.s32 %s11, %s18
      %p20 = scmp.eq.s32.totalorder %s19, 0
      %s22 = sadd.s32 %s21, 1
      %s23 = scalar_select %p20, %s21, %s22
      %p26 = pneg %p20
      %p27 = scmp.eq.s32.totalorder %s11, 1
      %p28 = por %p26, %p27
      %p29 = scmp.ne.s32.totalorder %s21, %s24
      %p30 = scmp.eq.s32.totalorder %s11, 0
      %p31 = por %p29, %p30
      %p32 = scmp.ne.s32.totalorder %s21, %s24
      %p33 = scmp.eq.s32.totalorder %s16, 1
      %p34 = por %p32, %p33
      %p35 = scmp.ne.s32.totalorder %s24, %s25
      %p36 = scmp.eq.s32.totalorder %s16, 0
      %p37 = por %p35, %p36
      %p38 = scmp.ne.s32.totalorder %s24, %s25
      %p39 = scmp.eq.s32.totalorder %s17, 1
      %p40 = por %p38, %p39
      %p42 = scmp.ne.s32.totalorder %s25, %s41
      %p43 = scmp.eq.s32.totalorder %s17, 0
      %p44 = por %p42, %p43
      %s45 = ssub.s32 %s11, %s18
      %p46 = scmp.eq.s32.totalorder %s45, 0
      %s48 = sadd.s32 %s47, 1
      %s49 = scalar_select %p46, %s47, %s48
      %p52 = pneg %p46
      %p53 = scmp.eq.s32.totalorder %s11, 1
      %p54 = por %p52, %p53
      %p55 = scmp.ne.s32.totalorder %s47, %s50
      %p56 = scmp.eq.s32.totalorder %s11, 0
      %p57 = por %p55, %p56
      %p58 = scmp.ne.s32.totalorder %s47, %s50
      %p59 = scmp.eq.s32.totalorder %s16, 1
      %p60 = por %p58, %p59
      %p61 = scmp.ne.s32.totalorder %s50, %s51
      %p62 = scmp.eq.s32.totalorder %s16, 0
      %p63 = por %p61, %p62
      %p64 = scmp.ne.s32.totalorder %s50, %s51
      %p65 = scmp.eq.s32.totalorder %s17, 1
      %p66 = por %p64, %p65
      %p68 = scmp.ne.s32.totalorder %s51, %s67
      %p69 = scmp.eq.s32.totalorder %s17, 0
      %p70 = por %p68, %p69
      %s71 = ssub.s32 %s11, %s18
      %p72 = scmp.eq.s32.totalorder %s71, 0
      %s74 = sadd.s32 %s73, 1
      %s75 = scalar_select %p72, %s73, %s74
      %p78 = pneg %p72
      %p79 = scmp.eq.s32.totalorder %s11, 1
      %p80 = por %p78, %p79
      %p81 = scmp.ne.s32.totalorder %s73, %s76
      %p82 = scmp.eq.s32.totalorder %s11, 0
      %p83 = por %p81, %p82
      %p84 = scmp.ne.s32.totalorder %s73, %s76
      %p85 = scmp.eq.s32.totalorder %s16, 1
      %p86 = por %p84, %p85
      %p87 = scmp.ne.s32.totalorder %s76, %s77
      %p88 = scmp.eq.s32.totalorder %s16, 0
      %p89 = por %p87, %p88
      %p90 = scmp.ne.s32.totalorder %s76, %s77
      %p91 = scmp.eq.s32.totalorder %s17, 1
      %p92 = por %p90, %p91
      %p94 = scmp.ne.s32.totalorder %s77, %s93
      %p95 = scmp.eq.s32.totalorder %s17, 0
      %p96 = por %p94, %p95
      %p97 = scmp.le.s32.totalorder 1, %s11
      %p98 = scmp.lt.s32.totalorder %s11, 3
      %p99 = pnand %p97, %p98
      %p100 = pneg %p99
      // Predicated region
      $region9: #{tpu_custom_call.1} parent=5 // pred_check
        _
      $region10: #{tpu_custom_call.1} parent=5 // pred_check_branch
        %102 = sbr.rel (%p99) target = $region12
      $region11: #{tpu_custom_call.1} parent=5 // pred_region
        %s103 = ssub.s32 %s11, 1
      $region12: #{tpu_custom_call.1} parent=5 // pred_fallthru
        _
      %p104 = scmp.lt.s32.totalorder %s11, 2
      // Predicated region
      $region13: #{tpu_custom_call.1} parent=5 // pred_check
        %p105 = pneg %p104
      $region14: #{tpu_custom_call.1} parent=5 // pred_check_branch
        %107 = sbr.rel (%p105) target = $region16
      $region15: #{tpu_custom_call.1} parent=5 // pred_region
        // Predicated region
        $region17: #{tpu_custom_call.1} parent=15 // pred_check
          %p108 = pneg %p31
        $region18: #{tpu_custom_call.1} parent=15 // pred_check_branch
          %110 = sbr.rel (%p108) target = $region20
        $region19: #{tpu_custom_call.1} parent=15 // pred_region
          %p111 = scmp.lt.s32.totalorder %s11, 1
          %s112 = scalar_select %p111, %s11, 1
          %s113 = smul.addr %s112, 16
          %s114 = smul.addr %s113, 8
          %s115 = scalar_lea.vmem %s0, %s114
        $region20: #{tpu_custom_call.1} parent=15 // pred_fallthru
          _
        // Predicated region
        $region21: #{tpu_custom_call.1} parent=15 // pred_check
          %p116 = pneg %p57
        $region22: #{tpu_custom_call.1} parent=15 // pred_check_branch
          %118 = sbr.rel (%p116) target = $region24
        $region23: #{tpu_custom_call.1} parent=15 // pred_region
          %p119 = scmp.lt.s32.totalorder %s11, 1
          %s120 = scalar_select %p119, %s11, 1
          %s121 = smul.addr %s120, 4
          %s122 = scalar_lea.vmem %s1, %s121
        $region24: #{tpu_custom_call.1} parent=15 // pred_fallthru
          _
      $region16: #{tpu_custom_call.1} parent=5 // pred_fallthru
        _
      %p123 = scmp.le.s32.totalorder 1, %s11
      %p124 = scmp.lt.s32.totalorder %s11, 3
      %p125 = pnand %p123, %p124
      %p126 = pneg %p125
      // Predicated region
      $region25: #{tpu_custom_call.1} parent=5 // pred_check
        _
      $region26: #{tpu_custom_call.1} parent=5 // pred_check_branch
        %128 = sbr.rel (%p125) target = $region28
      $region27: #{tpu_custom_call.1} parent=5 // pred_region
        %s129 = ssub.s32 %s11, 1
        %p130 = scmp.lt.s32.totalorder %s16, 1
        %s131 = scalar_select %p130, %s16, 1
        %s132 = smul.addr %s131, 16
        %s133 = smul.addr %s132, 8
        %s134 = scalar_lea.vmem %s0, %s133
        %p135 = pneg %p37
        %p136 = pneg %p34
        %p137 = scmp.lt.s32.totalorder %s16, 1
        %s138 = scalar_select %p137, %s16, 1
        %s139 = smul.addr %s138, 4
        %s140 = scalar_lea.vmem %s1, %s139
        %p141 = pneg %p63
        %p142 = pneg %p60
        %p143 = pneg %p89
        %p144 = pneg %p86
        %s145 = sand.u32 %s76, 1
        %s146 = scalar_lea.sflag [#allocation3], %s145
        %s147 = sand.u32 %s76, 1
        %s148 = smul.addr %s147, 128
        %s149 = scalar_lea.vmem [#allocation2], %s148
        %p150 = scmp.lt.s32.totalorder %s16, 1
        %s151 = scalar_select %p150, %s16, 1
        %s152 = smul.addr %s151, 16
        %s153 = smul.addr %s152, 8
        %s154 = scalar_lea.vmem %s0, %s153
        %p155 = scmp.lt.s32.totalorder %s16, 1
        %s156 = scalar_select %p155, %s16, 1
        %s157 = smul.addr %s156, 4
        %s158 = scalar_lea.vmem %s1, %s157
        %v159 = vld [vmem:[%s154] sm:$0xff]
        %v160 = vld [vmem:[%s154 + $0x8] sm:$0xff]
        %v161 = vld [vmem:[%s154 + $0x10] sm:$0xff]
        %v162 = vld [vmem:[%s154 + $0x18] sm:$0xff]
        %v163 = vld [vmem:[%s154 + $0x20] sm:$0xff]
        %v164 = vld [vmem:[%s154 + $0x28] sm:$0xff]
        %v165 = vld [vmem:[%s154 + $0x30] sm:$0xff]
        %v166 = vld [vmem:[%s154 + $0x38] sm:$0xff]
        %v167 = vld [vmem:[%s154 + $0x40] sm:$0xff]
        %v168 = vld [vmem:[%s154 + $0x48] sm:$0xff]
        %v169 = vld [vmem:[%s154 + $0x50] sm:$0xff]
        %v170 = vld [vmem:[%s154 + $0x58] sm:$0xff]
        %v171 = vld [vmem:[%s154 + $0x60] sm:$0xff]
        %v172 = vld [vmem:[%s154 + $0x68] sm:$0xff]
        %v173 = vld [vmem:[%s154 + $0x70] sm:$0xff]
        %v174 = vld [vmem:[%s154 + $0x78] sm:$0xff]
        %v175 = vld [vmem:[%s158] sm:$0x7]
        %vm176 = vcmask 23552
        %v178 = vsel %vm176, %v159, 0
        %v181 = vsel %vm176, %v160, 0
        %v184 = vsel %vm176, %v161, 0
        %v187 = vsel %vm176, %v162, 0
        %v190 = vsel %vm176, %v163, 0
        %v193 = vsel %vm176, %v164, 0
        %v196 = vsel %vm176, %v165, 0
        %v199 = vsel %vm176, %v166, 0
        %v202 = vsel %vm176, %v167, 0
        %v205 = vsel %vm176, %v168, 0
        %v208 = vsel %vm176, %v169, 0
        %v211 = vsel %vm176, %v170, 0
        %v214 = vsel %vm176, %v171, 0
        %v217 = vsel %vm176, %v172, 0
        %v220 = vsel %vm176, %v173, 0
        %v223 = vsel %vm176, %v174, 0
        %vm225 = vcmask 1042432
        %v227 = vsel %vm225, %v175, 0
        %229 = vmatprep.subr.mxu0 0.0
        %230 = vmatpush1.msra.mxu0 %v227
        %231 = vmatprep.subr.mxu0 0.0
        %232 = vmatpush1.msra.mxu0 0.0
        %233 = vmatprep.subr.mxu0 0.0
        %234 = vmatpush1.msra.mxu0 0.0
        %235 = vmatprep.subr.mxu0 0.0
        %236 = vmatpush1.msra.mxu0 0.0
        %237 = vmatprep.subr.mxu0 0.0
        %238 = vmatpush1.msra.mxu0 0.0
        %239 = vmatprep.subr.mxu0 0.0
        %240 = vmatpush1.msra.mxu0 0.0
        %241 = vmatprep.subr.mxu0 0.0
        %242 = vmatpush1.msra.mxu0 0.0
        %243 = vmatprep.subr.mxu0 0.0
        %244 = vmatpush1.msra.mxu0 0.0
        %245 = vmatprep.subr.mxu0 0.0
        %246 = vmatpush1.msra.mxu0 0.0
        %247 = vmatprep.subr.mxu0 0.0
        %248 = vmatpush1.msra.mxu0 0.0
        %249 = vmatprep.subr.mxu0 0.0
        %250 = vmatpush1.msra.mxu0 0.0
        %251 = vmatprep.subr.mxu0 0.0
        %252 = vmatpush1.msra.mxu0 0.0
        %253 = vmatprep.subr.mxu0 0.0
        %254 = vmatpush1.msra.mxu0 0.0
        %255 = vmatprep.subr.mxu0 0.0
        %256 = vmatpush1.msra.mxu0 0.0
        %257 = vmatprep.subr.mxu0 0.0
        %258 = vmatpush1.msra.mxu0 0.0
        %259 = vmatprep.subr.mxu0 0.0
        %260 = vmatpush1.msra.mxu0 0.0
        %261 = vmatprep.subr.mxu0 0.0
        %262 = vmatpush1.msra.mxu0 0.0
        %263 = vmatprep.subr.mxu0 0.0
        %264 = vmatpush1.msra.mxu0 0.0
        %265 = vmatprep.subr.mxu0 0.0
        %266 = vmatpush1.msra.mxu0 0.0
        %267 = vmatprep.subr.mxu0 0.0
        %268 = vmatpush1.msra.mxu0 0.0
        %269 = vmatprep.subr.mxu0 0.0
        %270 = vmatpush1.msra.mxu0 0.0
        %271 = vmatprep.subr.mxu0 0.0
        %272 = vmatpush1.msra.mxu0 0.0
        %273 = vmatprep.subr.mxu0 0.0
        %274 = vmatpush1.msra.mxu0 0.0
        %275 = vmatprep.subr.mxu0 0.0
        %276 = vmatpush1.msra.mxu0 0.0
        %277 = vmatprep.subr.mxu0 0.0
        %278 = vmatpush1.msra.mxu0 0.0
        %279 = vmatprep.subr.mxu0 0.0
        %280 = vmatpush1.msra.mxu0 0.0
        %281 = vmatprep.subr.mxu0 0.0
        %282 = vmatpush1.msra.mxu0 0.0
        %283 = vmatprep.subr.mxu0 0.0
        %284 = vmatpush1.msra.mxu0 0.0
        %285 = vmatprep.subr.mxu0 0.0
        %286 = vmatpush1.msra.mxu0 0.0
        %287 = vmatprep.subr.mxu0 0.0
        %288 = vmatpush1.msra.mxu0 0.0
        %289 = vmatprep.subr.mxu0 0.0
        %290 = vmatpush1.msra.mxu0 0.0
        %291 = vmatprep.subr.mxu0 0.0
        %292 = vmatpush1.msra.mxu0 0.0
        %293 = vmatprep.mubr.f32.mxu0 0.0
        %294 = vmatmul.mubr.f32.gmra.mrb[0].mxu0 %v178
        %v295 = vpop.f32.mrb[0].mxu0
        %v296 = vadd.f32 0.0, %v295
        %v297 = vpop.f32.mrb[0].mxu0
        %298 = vmatprep.mubr.f32.mxu0 0.0
        %299 = vmatmul.mubr.f32.gmra.mrb[0].mxu0 %v181
        %v300 = vpop.f32.mrb[0].mxu0
        %v301 = vadd.f32 0.0, %v300
        %v302 = vpop.f32.mrb[0].mxu0
        %303 = vmatprep.mubr.f32.mxu0 0.0
        %304 = vmatmul.mubr.f32.gmra.mrb[0].mxu0 %v184
        %v305 = vpop.f32.mrb[0].mxu0
        %v306 = vadd.f32 0.0, %v305
        %v307 = vpop.f32.mrb[0].mxu0
        %308 = vmatprep.mubr.f32.mxu0 0.0
        %309 = vmatmul.mubr.f32.gmra.mrb[0].mxu0 %v187
        %v310 = vpop.f32.mrb[0].mxu0
        %v311 = vadd.f32 0.0, %v310
        %v312 = vpop.f32.mrb[0].mxu0
        %313 = vmatprep.mubr.f32.mxu0 0.0
        %314 = vmatmul.mubr.f32.gmra.mrb[0].mxu0 %v190
        %v315 = vpop.f32.mrb[0].mxu0
        %v316 = vadd.f32 0.0, %v315
        %v317 = vpop.f32.mrb[0].mxu0
        %318 = vmatprep.mubr.f32.mxu0 0.0
        %319 = vmatmul.mubr.f32.gmra.mrb[0].mxu0 %v193
        %v320 = vpop.f32.mrb[0].mxu0
        %v321 = vadd.f32 0.0, %v320
        %v322 = vpop.f32.mrb[0].mxu0
        %323 = vmatprep.mubr.f32.mxu0 0.0
        %324 = vmatmul.mubr.f32.gmra.mrb[0].mxu0 %v196
        %v325 = vpop.f32.mrb[0].mxu0
        %v326 = vadd.f32 0.0, %v325
        %v327 = vpop.f32.mrb[0].mxu0
        %328 = vmatprep.mubr.f32.mxu0 0.0
        %329 = vmatmul.mubr.f32.gmra.mrb[0].mxu0 %v199
        %v330 = vpop.f32.mrb[0].mxu0
        %v331 = vadd.f32 0.0, %v330
        %v332 = vpop.f32.mrb[0].mxu0
        %333 = vmatprep.mubr.f32.mxu0 0.0
        %334 = vmatmul.mubr.f32.gmra.mrb[0].mxu0 %v202
        %v335 = vpop.f32.mrb[0].mxu0
        %v336 = vadd.f32 0.0, %v335
        %v337 = vpop.f32.mrb[0].mxu0
        %338 = vmatprep.mubr.f32.mxu0 0.0
        %339 = vmatmul.mubr.f32.gmra.mrb[0].mxu0 %v205
        %v340 = vpop.f32.mrb[0].mxu0
        %v341 = vadd.f32 0.0, %v340
        %v342 = vpop.f32.mrb[0].mxu0
        %343 = vmatprep.mubr.f32.mxu0 0.0
        %344 = vmatmul.mubr.f32.gmra.mrb[0].mxu0 %v208
        %v345 = vpop.f32.mrb[0].mxu0
        %v346 = vadd.f32 0.0, %v345
        %v347 = vpop.f32.mrb[0].mxu0
        %348 = vmatprep.mubr.f32.mxu0 0.0
        %349 = vmatmul.mubr.f32.gmra.mrb[0].mxu0 %v211
        %v350 = vpop.f32.mrb[0].mxu0
        %v351 = vadd.f32 0.0, %v350
        %v352 = vpop.f32.mrb[0].mxu0
        %353 = vmatprep.mubr.f32.mxu0 0.0
        %354 = vmatmul.mubr.f32.gmra.mrb[0].mxu0 %v214
        %v355 = vpop.f32.mrb[0].mxu0
        %v356 = vadd.f32 0.0, %v355
        %v357 = vpop.f32.mrb[0].mxu0
        %358 = vmatprep.mubr.f32.mxu0 0.0
        %359 = vmatmul.mubr.f32.gmra.mrb[0].mxu0 %v217
        %v360 = vpop.f32.mrb[0].mxu0
        %v361 = vadd.f32 0.0, %v360
        %v362 = vpop.f32.mrb[0].mxu0
        %363 = vmatprep.mubr.f32.mxu0 0.0
        %364 = vmatmul.mubr.f32.gmra.mrb[0].mxu0 %v220
        %v365 = vpop.f32.mrb[0].mxu0
        %v366 = vadd.f32 0.0, %v365
        %v367 = vpop.f32.mrb[0].mxu0
        %368 = vmatprep.mubr.f32.mxu0 0.0
        %369 = vmatmul.mubr.f32.gmra.mrb[0].mxu0 %v223
        %v370 = vpop.f32.mrb[0].mxu0
        %v371 = vadd.f32 0.0, %v370
        %v372 = vpop.f32.mrb[0].mxu0
        %373 = vdwg.mxu0
        %v374 = vmul.f32 %v159, %v159
        %v375 = vmul.f32 %v160, %v160
        %v376 = vmul.f32 %v161, %v161
        %v377 = vmul.f32 %v162, %v162
        %v378 = vmul.f32 %v163, %v163
        %v379 = vmul.f32 %v164, %v164
        %v380 = vmul.f32 %v165, %v165
        %v381 = vmul.f32 %v166, %v166
        %v382 = vmul.f32 %v167, %v167
        %v383 = vmul.f32 %v168, %v168
        %v384 = vmul.f32 %v169, %v169
        %v385 = vmul.f32 %v170, %v170
        %v386 = vmul.f32 %v171, %v171
        %v387 = vmul.f32 %v172, %v172
        %v388 = vmul.f32 %v173, %v173
        %v389 = vmul.f32 %v174, %v174
        %v390 = vsel %vm176, %v374, 0.0
        %391 = vadd.xlane.f32.xlu0 %v390
        %v392 = vpop.xlane.xlu0 %391
        %v393 = vsel %vm176, %v375, 0.0
        %394 = vadd.xlane.f32.xlu0 %v393
        %v395 = vpop.xlane.xlu0 %394
        %v396 = vsel %vm176, %v376, 0.0
        %397 = vadd.xlane.f32.xlu0 %v396
        %v398 = vpop.xlane.xlu0 %397
        %v399 = vsel %vm176, %v377, 0.0
        %400 = vadd.xlane.f32.xlu0 %v399
        %v401 = vpop.xlane.xlu0 %400
        %v402 = vsel %vm176, %v378, 0.0
        %403 = vadd.xlane.f32.xlu0 %v402
        %v404 = vpop.xlane.xlu0 %403
        %v405 = vsel %vm176, %v379, 0.0
        %406 = vadd.xlane.f32.xlu0 %v405
        %v407 = vpop.xlane.xlu0 %406
        %v408 = vsel %vm176, %v380, 0.0
        %409 = vadd.xlane.f32.xlu0 %v408
        %v410 = vpop.xlane.xlu0 %409
        %v411 = vsel %vm176, %v381, 0.0
        %412 = vadd.xlane.f32.xlu0 %v411
        %v413 = vpop.xlane.xlu0 %412
        %v414 = vsel %vm176, %v382, 0.0
        %415 = vadd.xlane.f32.xlu0 %v414
        %v416 = vpop.xlane.xlu0 %415
        %v417 = vsel %vm176, %v383, 0.0
        %418 = vadd.xlane.f32.xlu0 %v417
        %v419 = vpop.xlane.xlu0 %418
        %v420 = vsel %vm176, %v384, 0.0
        %421 = vadd.xlane.f32.xlu0 %v420
        %v422 = vpop.xlane.xlu0 %421
        %v423 = vsel %vm176, %v385, 0.0
        %424 = vadd.xlane.f32.xlu0 %v423
        %v425 = vpop.xlane.xlu0 %424
        %v426 = vsel %vm176, %v386, 0.0
        %427 = vadd.xlane.f32.xlu0 %v426
        %v428 = vpop.xlane.xlu0 %427
        %v429 = vsel %vm176, %v387, 0.0
        %430 = vadd.xlane.f32.xlu0 %v429
        %v431 = vpop.xlane.xlu0 %430
        %v432 = vsel %vm176, %v388, 0.0
        %433 = vadd.xlane.f32.xlu0 %v432
        %v434 = vpop.xlane.xlu0 %433
        %v435 = vsel %vm176, %v389, 0.0
        %436 = vadd.xlane.f32.xlu0 %v435
        %v437 = vpop.xlane.xlu0 %436
        %v438 = vmul.f32 %v175, %v175
        %v439 = vsel %vm225, %v438, 0.0
        %v440 = vrot.slane %v439, 4
        %v441 = vadd.f32 %v439, %v440
        %v442 = vrot.slane %v441, 2
        %v443 = vadd.f32 %v441, %v442
        %v444 = vrot.slane %v443, 1
        %v445 = vadd.f32 %v443, %v444
        %v446 = vadd.f32 %v392, %v445
        %v447 = vadd.f32 %v395, %v445
        %v448 = vadd.f32 %v398, %v445
        %v449 = vadd.f32 %v401, %v445
        %v450 = vadd.f32 %v404, %v445
        %v451 = vadd.f32 %v407, %v445
        %v452 = vadd.f32 %v410, %v445
        %v453 = vadd.f32 %v413, %v445
        %v454 = vadd.f32 %v416, %v445
        %v455 = vadd.f32 %v419, %v445
        %v456 = vadd.f32 %v422, %v445
        %v457 = vadd.f32 %v425, %v445
        %v458 = vadd.f32 %v428, %v445
        %v459 = vadd.f32 %v431, %v445
        %v460 = vadd.f32 %v434, %v445
        %v461 = vadd.f32 %v437, %v445
        %v462 = vmul.f32 %v296, 2.0
        %v463 = vmul.f32 %v301, 2.0
        %v464 = vmul.f32 %v306, 2.0
        %v465 = vmul.f32 %v311, 2.0
        %v466 = vmul.f32 %v316, 2.0
        %v467 = vmul.f32 %v321, 2.0
        %v468 = vmul.f32 %v326, 2.0
        %v469 = vmul.f32 %v331, 2.0
        %v470 = vmul.f32 %v336, 2.0
        %v471 = vmul.f32 %v341, 2.0
        %v472 = vmul.f32 %v346, 2.0
        %v473 = vmul.f32 %v351, 2.0
        %v474 = vmul.f32 %v356, 2.0
        %v475 = vmul.f32 %v361, 2.0
        %v476 = vmul.f32 %v366, 2.0
        %v477 = vmul.f32 %v371, 2.0
        %v478 = vsub.f32 %v446, %v462
        %v479 = vsub.f32 %v447, %v463
        %v480 = vsub.f32 %v448, %v464
        %v481 = vsub.f32 %v449, %v465
        %v482 = vsub.f32 %v450, %v466
        %v483 = vsub.f32 %v451, %v467
        %v484 = vsub.f32 %v452, %v468
        %v485 = vsub.f32 %v453, %v469
        %v486 = vsub.f32 %v454, %v470
        %v487 = vsub.f32 %v455, %v471
        %v488 = vsub.f32 %v456, %v472
        %v489 = vsub.f32 %v457, %v473
        %v490 = vsub.f32 %v458, %v474
        %v491 = vsub.f32 %v459, %v475
        %v492 = vsub.f32 %v460, %v476
        %v493 = vsub.f32 %v461, %v477
        %494 = vst [vmem:[%s149] sm:$0xff] %v478
        %495 = vst [vmem:[%s149 + $0x8] sm:$0xff] %v479
        %496 = vst [vmem:[%s149 + $0x10] sm:$0xff] %v480
        %497 = vst [vmem:[%s149 + $0x18] sm:$0xff] %v481
        %498 = vst [vmem:[%s149 + $0x20] sm:$0xff] %v482
        %499 = vst [vmem:[%s149 + $0x28] sm:$0xff] %v483
        %500 = vst [vmem:[%s149 + $0x30] sm:$0xff] %v484
        %501 = vst [vmem:[%s149 + $0x38] sm:$0xff] %v485
        %502 = vst [vmem:[%s149 + $0x40] sm:$0xff] %v486
        %503 = vst [vmem:[%s149 + $0x48] sm:$0xff] %v487
        %504 = vst [vmem:[%s149 + $0x50] sm:$0xff] %v488
        %505 = vst [vmem:[%s149 + $0x58] sm:$0xff] %v489
        %506 = vst [vmem:[%s149 + $0x60] sm:$0xff] %v490
        %507 = vst [vmem:[%s149 + $0x68] sm:$0xff] %v491
        %508 = vst [vmem:[%s149 + $0x70] sm:$0xff] %v492
        %509 = vst [vmem:[%s149 + $0x78] sm:$0xff] %v493
        %s510 = sand.u32 %s76, 1
        %s511 = scalar_lea.sflag [#allocation3], %s510
        %s512 = sand.u32 %s76, 1
        %s513 = smul.addr %s512, 128
        %s514 = scalar_lea.vmem [#allocation2], %s513
        // Predicated region
        $region29: #{tpu_custom_call.1} parent=27 // pred_check
          %p515 = pneg %p86
        $region30: #{tpu_custom_call.1} parent=27 // pred_check_branch
          %517 = sbr.rel (%p515) target = $region32
        $region31: #{tpu_custom_call.1} parent=27 // pred_region
          %s519 = ssub.s32 2048, 2048
          %520 = vsyncadd %s511, %s519
          %s521 = smul.addr %s16, 16
          %s522 = smul.addr %s521, 128
          %s523 = scalar_lea.hbm %s2, %s522
          %s524 = sshll.u32 %s514, 4
          %s525 = int_to_ptr.vmem [resolvable:$true] %s524
          %530 = dma.vmem_to_hbm [thread:$0]  %s525, 2048, %s523, %s511, 128, 128, 8
        $region32: #{tpu_custom_call.1} parent=27 // pred_fallthru
          _
      $region28: #{tpu_custom_call.1} parent=5 // pred_fallthru
        _
      %p531 = scmp.le.s32.totalorder 2, %s11
      // Predicated region
      $region33: #{tpu_custom_call.1} parent=5 // pred_check
        %p532 = pneg %p531
      $region34: #{tpu_custom_call.1} parent=5 // pred_check_branch
        %534 = sbr.rel (%p532) target = $region36
      $region35: #{tpu_custom_call.1} parent=5 // pred_region
        %s535 = ssub.s32 %s11, 2
        // Predicated region
        $region37: #{tpu_custom_call.1} parent=35 // pred_check
          %p536 = pneg %p92
        $region38: #{tpu_custom_call.1} parent=35 // pred_check_branch
          %538 = sbr.rel (%p536) target = $region40
        $region39: #{tpu_custom_call.1} parent=35 // pred_region
          %s539 = sand.u32 %s77, 1
          %s540 = scalar_lea.sflag [#allocation3], %s539
          %s541 = sand.u32 %s77, 1
          %s542 = smul.addr %s541, 128
          %s543 = scalar_lea.vmem [#allocation2], %s542
          %544 = dma.done %s540, 2048
        $region40: #{tpu_custom_call.1} parent=35 // pred_fallthru
          _
      $region36: #{tpu_custom_call.1} parent=5 // pred_fallthru
        _
    $region6: #{tpu_custom_call.1} parent=1 // loop_footer
      %s15 = sadd.s32 1, %s11
    $region7: #{tpu_custom_call.1} parent=1 // loop_footer_branch
      %10 = sbr.rel target = $region3
    $region8: #{tpu_custom_call.1} parent=1 // loop_exit
      _
    %545 = vsyncpa [#allocation3], 1
    %s546 = scalar_lea.sflag [#allocation3], 1
    %547 = vsyncpa %s546, 1

</llo_original>
